<compile_context>
chip_gen: v7x
topology: tpu7x:2x2x1
jax: 0.10.0
libtpu: 0.0.40
codegen_flags: <defaults>
</compile_context>

<pallas_src>
import jax
import jax.numpy as jnp
from jax import lax
from jax.experimental import pallas as pl
from jax.experimental.pallas import tpu as pltpu


def _nmf_kernel(user_idx_ref, item_idx_ref,      # int32 (1, bt)  VMEM blocks
                user_tab_ref, item_tab_ref,      # f32 (K, N_*)   VMEM resident
                out_ref):                        # f32 (1, bt)    lane-dense
    _, n_users = user_tab_ref.shape
    _, n_items = item_tab_ref.shape
    bt = out_ref.shape[-1]

    # ReLU hoisted onto the (tiny) resident tables, in (K, N) orientation.
    ut = jnp.maximum(user_tab_ref[...], 0.0)     # (K, Nu)
    vt = jnp.maximum(item_tab_ref[...], 0.0)     # (K, Ni)

    uidx = user_idx_ref[...]                     # (1, bt) int32
    iidx = item_idx_ref[...]                     # (1, bt) int32

    # One-hot selection matrices: (N, bt).  Rows not matching any index
    # (e.g. batch padding with -1) are all zero.
    onehot_u = (lax.broadcasted_iota(jnp.int32, (n_users, bt), 0) == uidx
                ).astype(jnp.float32)
    onehot_v = (lax.broadcasted_iota(jnp.int32, (n_items, bt), 0) == iidx
                ).astype(jnp.float32)

    # MXU gather: (K, N) @ (N, bt) -> (K, bt).  HIGHEST precision keeps the
    # selected f32 table values exact (these matmuls are ~0.5 MFLOP, free).
    u_kb = jnp.dot(ut, onehot_u, preferred_element_type=jnp.float32,
                   precision=jax.lax.Precision.HIGHEST)      # (K, bt)
    v_kb = jnp.dot(vt, onehot_v, preferred_element_type=jnp.float32,
                   precision=jax.lax.Precision.HIGHEST)      # (K, bt)

    # Elementwise product on full-lane (K, bt) tiles, reduce K (sublane axis)
    # straight into the lane-dense (1, bt) output block.
    out_ref[...] = jnp.sum(u_kb * v_kb, axis=0, keepdims=True)


def nmf_forward(user_idx, item_idx, user_emb_w, item_emb_w, *,
                max_batch_tile=1024):
    """user_idx, item_idx: int [B]; *_emb_w: float32 [N, K] -> float32 [B]."""
    assert max_batch_tile % 128 == 0, "max_batch_tile must be a multiple of 128"

    user_idx = jnp.asarray(user_idx, jnp.int32)
    item_idx = jnp.asarray(item_idx, jnp.int32)
    # Tables pre-transposed to (K, N) so the kernel is entirely (K, bt).
    user_tab_t = jnp.asarray(user_emb_w, jnp.float32).T      # (K, Nu)
    item_tab_t = jnp.asarray(item_emb_w, jnp.float32).T      # (K, Ni)

    B = user_idx.shape[0]

    # Batch tile: multiple of 128 so every index/output block is lane-dense
    # and unmasked; one tile when the padded batch fits, else 1024-wide tiles.
    b128 = ((B + 127) // 128) * 128
    bt = min(b128, max_batch_tile)
    num_tiles = pl.cdiv(B, bt)
    b_pad = num_tiles * bt

    pad = b_pad - B
    if pad:
        # -1 never matches any table row -> zero one-hot column -> output 0.
        user_idx = jnp.pad(user_idx, (0, pad), constant_values=-1)
        item_idx = jnp.pad(item_idx, (0, pad), constant_values=-1)

    user_idx2 = user_idx.reshape(1, b_pad)
    item_idx2 = item_idx.reshape(1, b_pad)

    out = pl.pallas_call(
        _nmf_kernel,
        grid=(num_tiles,),
        in_specs=[
            pl.BlockSpec((1, bt), lambda t: (0, t)),                 # user_idx
            pl.BlockSpec((1, bt), lambda t: (0, t)),                 # item_idx
            pl.BlockSpec(memory_space=pltpu.MemorySpace.VMEM),       # user table
            pl.BlockSpec(memory_space=pltpu.MemorySpace.VMEM),       # item table
        ],
        out_specs=pl.BlockSpec((1, bt), lambda t: (0, t)),
        out_shape=jax.ShapeDtypeStruct((1, b_pad), jnp.float32),
        compiler_params=pltpu.CompilerParams(
            dimension_semantics=("parallel",)),  # batch tiles are independent
    )(user_idx2, item_idx2, user_tab_t, item_tab_t)

    return out.reshape(-1)[:B]


def nmf_reference(user_idx, item_idx, user_emb_w, item_emb_w):
    u = jnp.maximum(user_emb_w[user_idx], 0.0)
    v = jnp.maximum(item_emb_w[item_idx], 0.0)
    return jnp.sum(u * v, axis=1)


if __name__ == "__main__":
    num_users, num_items, k = 64, 48, 32
    batch = 8

    key = jax.random.PRNGKey(0)
    k_u, k_i, k_ui, k_ii = jax.random.split(key, 4)

    # Deterministic init matching nn.Embedding.weight.data.uniform_(0.0, 0.05)
    user_emb_w = jax.random.uniform(k_u, (num_users, k), jnp.float32, 0.0, 0.05)
    item_emb_w = jax.random.uniform(k_i, (num_items, k), jnp.float32, 0.0, 0.05)

    user_idx = jax.random.randint(k_ui, (batch,), 0, num_users, dtype=jnp.int32)
    item_idx = jax.random.randint(k_ii, (batch,), 0, num_items, dtype=jnp.int32)

    out = nmf_forward(user_idx, item_idx, user_emb_w, item_emb_w)
    out = jax.block_until_ready(out)

    ref = nmf_reference(user_idx, item_idx, user_emb_w, item_emb_w)
    assert out.shape == (batch,)
    assert jnp.allclose(out, ref, atol=1e-6, rtol=1e-6)

    print("KERNEL_OK")
</pallas_src>

<mosaic_0001>
module attributes {stable_mosaic.version = 11 : i64} {
  func.func @_nmf_kernel(%arg0: i32, %arg1: memref<1x128xi32, #tpu.memory_space<vmem>>, %arg2: memref<1x128xi32, #tpu.memory_space<vmem>>, %arg3: memref<32x64xf32, #tpu.memory_space<vmem>>, %arg4: memref<32x48xf32, #tpu.memory_space<vmem>>, %arg5: memref<1x128xf32, #tpu.memory_space<vmem>>) attributes {dimension_semantics = [#tpu.dimension_semantics<parallel>], iteration_bounds = array<i64: 1>, scalar_prefetch = 0 : i64, scratch_operands = 0 : i64, tpu.core_type = #tpu.core_type<tc>, window_params = [{transform_indices = @transform_0, window_bounds = array<i64: 1, 128>}, {transform_indices = @transform_1, window_bounds = array<i64: 1, 128>}, {pipeline_mode = #tpu.pipeline_mode<synchronous>, transform_indices = @transform_2, window_bounds = array<i64: 32, 64>}, {pipeline_mode = #tpu.pipeline_mode<synchronous>, transform_indices = @transform_3, window_bounds = array<i64: 32, 48>}, {transform_indices = @transform_4, window_bounds = array<i64: 1, 128>}]} {
    %c0 = arith.constant 0 : index
    %c0_0 = arith.constant 0 : index
    %0 = vector.load %arg3[%c0, %c0_0] : memref<32x64xf32, #tpu.memory_space<vmem>>, vector<32x64xf32>
    %cst = arith.constant 0.000000e+00 : f32
    %1 = vector.broadcast %cst : f32 to vector<32x64xf32>
    %2 = arith.maximumf %0, %1 : vector<32x64xf32>
    %c0_1 = arith.constant 0 : index
    %c0_2 = arith.constant 0 : index
    %3 = vector.load %arg4[%c0_1, %c0_2] : memref<32x48xf32, #tpu.memory_space<vmem>>, vector<32x48xf32>
    %cst_3 = arith.constant 0.000000e+00 : f32
    %4 = vector.broadcast %cst_3 : f32 to vector<32x48xf32>
    %5 = arith.maximumf %3, %4 : vector<32x48xf32>
    %c0_4 = arith.constant 0 : index
    %c0_5 = arith.constant 0 : index
    %6 = vector.load %arg1[%c0_4, %c0_5] : memref<1x128xi32, #tpu.memory_space<vmem>>, vector<1x128xi32>
    %c0_6 = arith.constant 0 : index
    %c0_7 = arith.constant 0 : index
    %7 = vector.load %arg2[%c0_6, %c0_7] : memref<1x128xi32, #tpu.memory_space<vmem>>, vector<1x128xi32>
    %8 = tpu.iota {dimensions = array<i32: 0>} : vector<64x128xi32>
    %9 = vector.broadcast %6 : vector<1x128xi32> to vector<64x128xi32>
    %10 = arith.cmpi eq, %8, %9 : vector<64x128xi32>
    %11 = arith.extui %10 : vector<64x128xi1> to vector<64x128xi32>
    %12 = arith.sitofp %11 : vector<64x128xi32> to vector<64x128xf32>
    %13 = tpu.iota {dimensions = array<i32: 0>} : vector<48x128xi32>
    %14 = vector.broadcast %7 : vector<1x128xi32> to vector<48x128xi32>
    %15 = arith.cmpi eq, %13, %14 : vector<48x128xi32>
    %16 = arith.extui %15 : vector<48x128xi1> to vector<48x128xi32>
    %17 = arith.sitofp %16 : vector<48x128xi32> to vector<48x128xf32>
    %cst_8 = arith.constant dense<0.000000e+00> : vector<32x128xf32>
    %18 = tpu.matmul %2, %12, %cst_8 {dimension_numbers = #tpu.dot_dimension_numbers<[1], [0], [0], [1], [0, 0, 1, 1], [], []>, precision = #tpu.contract_precision<fp32>} : vector<32x64xf32>, vector<64x128xf32>, vector<32x128xf32> -> vector<32x128xf32>
    %cst_9 = arith.constant dense<0.000000e+00> : vector<32x128xf32>
    %19 = tpu.matmul %5, %17, %cst_9 {dimension_numbers = #tpu.dot_dimension_numbers<[1], [0], [0], [1], [0, 0, 1, 1], [], []>, precision = #tpu.contract_precision<fp32>} : vector<32x48xf32>, vector<48x128xf32>, vector<32x128xf32> -> vector<32x128xf32>
    %20 = arith.mulf %18, %19 : vector<32x128xf32>
    %cst_10 = arith.constant dense<0.000000e+00> : vector<128xf32>
    %21 = vector.multi_reduction <add>, %20, %cst_10 [0] : vector<32x128xf32> to vector<128xf32>
    %22 = vector.shape_cast %21 : vector<128xf32> to vector<1x128xf32>
    %c0_11 = arith.constant 0 : index
    %c0_12 = arith.constant 0 : index
    %23 = vector.load %arg5[%c0_11, %c0_12] : memref<1x128xf32, #tpu.memory_space<vmem>>, vector<1x128xf32>
    tpu.vector_store %arg5[%c0_11, %c0_12], %22 {strides = array<i32>} : memref<1x128xf32, #tpu.memory_space<vmem>>, vector<1x128xf32>,
    return
  }
  func.func @transform_0(%arg0: i32) -> (i32, i32) {
    %c0_i32 = arith.constant 0 : i32
    %c0_i32_0 = arith.constant 0 : i32
    return %c0_i32, %arg0 : i32, i32
  }
  func.func @transform_1(%arg0: i32) -> (i32, i32) {
    %c0_i32 = arith.constant 0 : i32
    %c0_i32_0 = arith.constant 0 : i32
    return %c0_i32, %arg0 : i32, i32
  }
  func.func @transform_2(%arg0: i32) -> (i32, i32) {
    %c0_i32 = arith.constant 0 : i32
    %c0_i32_0 = arith.constant 0 : i32
    %c0_i32_1 = arith.constant 0 : i32
    return %c0_i32, %c0_i32_0 : i32, i32
  }
  func.func @transform_3(%arg0: i32) -> (i32, i32) {
    %c0_i32 = arith.constant 0 : i32
    %c0_i32_0 = arith.constant 0 : i32
    %c0_i32_1 = arith.constant 0 : i32
    return %c0_i32, %c0_i32_0 : i32, i32
  }
  func.func @transform_4(%arg0: i32) -> (i32, i32) {
    %c0_i32 = arith.constant 0 : i32
    %c0_i32_0 = arith.constant 0 : i32
    return %c0_i32, %arg0 : i32, i32
  }
}

</mosaic_0001>

<llo_original>
// kernel: tpu_custom_call.1
$region0: #{tpu_custom_call.1}
  #allocation0 [shape = 'u32[]', space=smem, size = 0x4, offset = 0x4, fixed_abs, tag = 'smem constant byte address 0x4 - core index']
  #allocation1 [shape = 'u32[144,128]{1,0:T(1,128)}', space=vmem, size = 0x12000, scoped, tag = 'internal scratch']
  %s0 = inlined_call_operand.hbm [shape: s32[1,128], index: 0, kind: input, shape index: {}]
  %s1 = inlined_call_operand.vmem [shape: s32[1,128], index: 1, kind: input, shape index: {}]
  %s2 = inlined_call_operand.hbm [shape: f32[32,64], index: 2, kind: input, shape index: {}]
  %s3 = inlined_call_operand.hbm [shape: f32[32,48], index: 3, kind: input, shape index: {}]
  %s4 = inlined_call_operand.hbm [shape: f32[1,128], index: 4, kind: output, shape index: {}]
  %s5 = sld [smem:[#allocation0]]
  $region38: #{tpu_custom_call.1} parent=0
    _
  %s7 = ssub.s32 1, %s5
  %s8 = scalar_select 0, %s7, %s5
  $region1: #{tpu_custom_call.1} parent=0
    #allocation2 [shape = 'u8[512]{0}', space=vmem, size = 0x400, scoped, tag = 'input window, operand 0, single buffered']
    #allocation3 [shape = 's32[1]{0}', space=sflag, size = 0x4, scoped, tag = 'scoped memory for tpu_custom_call.1']
    #allocation4 [shape = 's32[1]{0}', space=sflag, size = 0x4, scoped, tag = 'scoped memory for tpu_custom_call.1']
    #allocation5 [shape = 'u8[16384]{0}', space=vmem, size = 0x4000, scoped, tag = 'input window, operand 2, single buffered']
    #allocation6 [shape = 's32[1]{0}', space=sflag, size = 0x4, scoped, tag = 'scoped memory for tpu_custom_call.1']
    #allocation7 [shape = 'u8[16384]{0}', space=vmem, size = 0x4000, scoped, tag = 'input window, operand 3, single buffered']
    #allocation8 [shape = 'u8[512]{0}', space=vmem, size = 0x400, scoped, tag = 'output window, operand 0, single buffered']
    %9 = vsyncpa [#allocation3], 0
    %10 = vsyncpa [#allocation6], 0
    %11 = vsyncpa [#allocation4], 0
    // Predicated region
    $region2: #{tpu_custom_call.1} parent=1 // pred_check
      _
    $region3: #{tpu_custom_call.1} parent=1 // pred_check_branch
      %13 = sbr.rel (0) target = $region5
    $region4: #{tpu_custom_call.1} parent=1 // pred_region
      %s15 = ssub.s32 16, 16
      %16 = vsyncadd [#allocation3], %s15
      %s18 = sshll.u32 [#allocation2], 4
      %s19 = int_to_ptr.vmem [resolvable:$true] %s18
      %21 = dma.hbm_to_vmem [thread:$0]  %s0, 16, %s19, [#allocation3]
    $region5: #{tpu_custom_call.1} parent=1 // pred_fallthru
      _
    // Predicated region
    $region6: #{tpu_custom_call.1} parent=1 // pred_check
      _
    $region7: #{tpu_custom_call.1} parent=1 // pred_check_branch
      %23 = sbr.rel (0) target = $region9
    $region8: #{tpu_custom_call.1} parent=1 // pred_region
      _
    $region9: #{tpu_custom_call.1} parent=1 // pred_fallthru
      _
    // Predicated region
    $region10: #{tpu_custom_call.1} parent=1 // pred_check
      _
    $region11: #{tpu_custom_call.1} parent=1 // pred_check_branch
      %25 = sbr.rel (0) target = $region13
    $region12: #{tpu_custom_call.1} parent=1 // pred_region
      %s27 = ssub.s32 512, 512
      %28 = vsyncadd [#allocation6], %s27
      %s29 = sshll.u32 [#allocation5], 4
      %s30 = int_to_ptr.vmem [resolvable:$true] %s29
      %35 = dma.hbm_to_vmem [thread:$0]  %s2, 512, %s30, [#allocation6], 128, 128, 8
    $region13: #{tpu_custom_call.1} parent=1 // pred_fallthru
      _
    // Predicated region
    $region14: #{tpu_custom_call.1} parent=1 // pred_check
      _
    $region15: #{tpu_custom_call.1} parent=1 // pred_check_branch
      %37 = sbr.rel (0) target = $region17
    $region16: #{tpu_custom_call.1} parent=1 // pred_region
      %s39 = ssub.s32 512, 512
      %40 = vsyncadd [#allocation6], %s39
      %s41 = sshll.u32 [#allocation7], 4
      %s42 = int_to_ptr.vmem [resolvable:$true] %s41
      %47 = dma.hbm_to_vmem [thread:$0]  %s3, 512, %s42, [#allocation6], 128, 128, 8
    $region17: #{tpu_custom_call.1} parent=1 // pred_fallthru
      _
    // Predicated region
    $region18: #{tpu_custom_call.1} parent=1 // pred_check
      _
    $region19: #{tpu_custom_call.1} parent=1 // pred_check_branch
      %49 = sbr.rel (0) target = $region21
    $region20: #{tpu_custom_call.1} parent=1 // pred_region
      %50 = dma.done [#allocation3], 16
    $region21: #{tpu_custom_call.1} parent=1 // pred_fallthru
      _
    // Predicated region
    $region22: #{tpu_custom_call.1} parent=1 // pred_check
      _
    $region23: #{tpu_custom_call.1} parent=1 // pred_check_branch
      %52 = sbr.rel (0) target = $region25
    $region24: #{tpu_custom_call.1} parent=1 // pred_region
      %53 = dma.done [#allocation6], 512
    $region25: #{tpu_custom_call.1} parent=1 // pred_fallthru
      _
    // Predicated region
    $region26: #{tpu_custom_call.1} parent=1 // pred_check
      _
    $region27: #{tpu_custom_call.1} parent=1 // pred_check_branch
      %55 = sbr.rel (0) target = $region29
    $region28: #{tpu_custom_call.1} parent=1 // pred_region
      %56 = dma.done [#allocation6], 512
    $region29: #{tpu_custom_call.1} parent=1 // pred_fallthru
      _
    %v57 = vld [vmem:[#allocation5] sm:$0xff]
    %v58 = vld [vmem:[#allocation5 + $0x8] sm:$0xff]
    %v59 = vld [vmem:[#allocation5 + $0x10] sm:$0xff]
    %v60 = vld [vmem:[#allocation5 + $0x18] sm:$0xff]
    %v61 = vmax.f32 %v57, 0.0
    %v62 = vmax.f32 %v58, 0.0
    %v63 = vmax.f32 %v59, 0.0
    %v64 = vmax.f32 %v60, 0.0
    %v65 = vld [vmem:[#allocation7] sm:$0xff]
    %v66 = vld [vmem:[#allocation7 + $0x8] sm:$0xff]
    %v67 = vld [vmem:[#allocation7 + $0x10] sm:$0xff]
    %v68 = vld [vmem:[#allocation7 + $0x18] sm:$0xff]
    %v69 = vmax.f32 %v65, 0.0
    %v70 = vmax.f32 %v66, 0.0
    %v71 = vmax.f32 %v67, 0.0
    %v72 = vmax.f32 %v68, 0.0
    %v73 = vld [vmem:[#allocation2] sm:$0x1]
    %v74 = vld [vmem:[%s1] sm:$0x1]
    %v75 = vlaneseq
    %v76 = vshrl.u32 %v75, 7
    %v77 = vadd.s32 %v76, 8
    %v78 = vadd.s32 %v76, 16
    %v79 = vadd.s32 %v76, 24
    %v80 = vadd.s32 %v76, 32
    %v81 = vadd.s32 %v76, 40
    %v82 = vadd.s32 %v76, 48
    %v83 = vadd.s32 %v76, 56
    %v84 = vlaneseq
    %v85 = vshrl.u32 %v84, 7
    %v86 = vsub.s32 0, %v85
    %v87 = vrot.slane %v73, %v86
    %vm88 = vcmp.eq.s32.totalorder %v76, %v87
    %vm89 = vcmp.eq.s32.totalorder %v77, %v87
    %vm90 = vcmp.eq.s32.totalorder %v78, %v87
    %vm91 = vcmp.eq.s32.totalorder %v79, %v87
    %vm92 = vcmp.eq.s32.totalorder %v80, %v87
    %vm93 = vcmp.eq.s32.totalorder %v81, %v87
    %vm94 = vcmp.eq.s32.totalorder %v82, %v87
    %vm95 = vcmp.eq.s32.totalorder %v83, %v87
    %v96 = vsel %vm88, 1, 0
    %v97 = vsel %vm89, 1, 0
    %v98 = vsel %vm90, 1, 0
    %v99 = vsel %vm91, 1, 0
    %v100 = vsel %vm92, 1, 0
    %v101 = vsel %vm93, 1, 0
    %v102 = vsel %vm94, 1, 0
    %v103 = vsel %vm95, 1, 0
    %v104 = vcvt.s32.f32 %v96
    %v105 = vcvt.s32.f32 %v97
    %v106 = vcvt.s32.f32 %v98
    %v107 = vcvt.s32.f32 %v99
    %v108 = vcvt.s32.f32 %v100
    %v109 = vcvt.s32.f32 %v101
    %v110 = vcvt.s32.f32 %v102
    %v111 = vcvt.s32.f32 %v103
    %v112 = vlaneseq
    %v113 = vshrl.u32 %v112, 7
    %v114 = vsub.s32 0, %v113
    %v115 = vrot.slane %v74, %v114
    %vm116 = vcmp.eq.s32.totalorder %v76, %v115
    %vm117 = vcmp.eq.s32.totalorder %v77, %v115
    %vm118 = vcmp.eq.s32.totalorder %v78, %v115
    %vm119 = vcmp.eq.s32.totalorder %v79, %v115
    %vm120 = vcmp.eq.s32.totalorder %v80, %v115
    %vm121 = vcmp.eq.s32.totalorder %v81, %v115
    %v122 = vsel %vm116, 1, 0
    %v123 = vsel %vm117, 1, 0
    %v124 = vsel %vm118, 1, 0
    %v125 = vsel %vm119, 1, 0
    %v126 = vsel %vm120, 1, 0
    %v127 = vsel %vm121, 1, 0
    %v128 = vcvt.s32.f32 %v122
    %v129 = vcvt.s32.f32 %v123
    %v130 = vcvt.s32.f32 %v124
    %v131 = vcvt.s32.f32 %v125
    %v132 = vcvt.s32.f32 %v126
    %v133 = vcvt.s32.f32 %v127
    %vm134 = vcmask 523264
    %v136 = vsel %vm134, %v61, 0
    %v139 = vsel %vm134, %v62, 0
    %v142 = vsel %vm134, %v63, 0
    %v145 = vsel %vm134, %v64, 0
    %147 = vmatprep.subr.mxu0 0.0
    %v148 = vand.u32 %v104, 4294901760
    %149 = vmatpush1.msra.mxu0 %v148
    %150 = vmatprep.subr.mxu0 0.0
    %v151 = vand.u32 %v105, 4294901760
    %152 = vmatpush1.msra.mxu0 %v151
    %153 = vmatprep.subr.mxu0 0.0
    %v154 = vand.u32 %v106, 4294901760
    %155 = vmatpush1.msra.mxu0 %v154
    %156 = vmatprep.subr.mxu0 0.0
    %v157 = vand.u32 %v107, 4294901760
    %158 = vmatpush1.msra.mxu0 %v157
    %159 = vmatprep.subr.mxu0 0.0
    %v160 = vand.u32 %v108, 4294901760
    %161 = vmatpush1.msra.mxu0 %v160
    %162 = vmatprep.subr.mxu0 0.0
    %v163 = vand.u32 %v109, 4294901760
    %164 = vmatpush1.msra.mxu0 %v163
    %165 = vmatprep.subr.mxu0 0.0
    %v166 = vand.u32 %v110, 4294901760
    %167 = vmatpush1.msra.mxu0 %v166
    %168 = vmatprep.subr.mxu0 0.0
    %v169 = vand.u32 %v111, 4294901760
    %170 = vmatpush1.msra.mxu0 %v169
    %171 = vmatprep.subr.mxu0 0.0
    %172 = vmatpush1.msra.mxu0 0.0
    %173 = vmatprep.subr.mxu0 0.0
    %174 = vmatpush1.msra.mxu0 0.0
    %175 = vmatprep.subr.mxu0 0.0
    %176 = vmatpush1.msra.mxu0 0.0
    %177 = vmatprep.subr.mxu0 0.0
    %178 = vmatpush1.msra.mxu0 0.0
    %179 = vmatprep.subr.mxu0 0.0
    %180 = vmatpush1.msra.mxu0 0.0
    %181 = vmatprep.subr.mxu0 0.0
    %182 = vmatpush1.msra.mxu0 0.0
    %183 = vmatprep.subr.mxu0 0.0
    %184 = vmatpush1.msra.mxu0 0.0
    %185 = vmatprep.subr.mxu0 0.0
    %186 = vmatpush1.msra.mxu0 0.0
    %187 = vmatprep.subr.mxu0 0.0
    %188 = vmatpush1.msra.mxu0 0.0
    %189 = vmatprep.subr.mxu0 0.0
    %190 = vmatpush1.msra.mxu0 0.0
    %191 = vmatprep.subr.mxu0 0.0
    %192 = vmatpush1.msra.mxu0 0.0
    %193 = vmatprep.subr.mxu0 0.0
    %194 = vmatpush1.msra.mxu0 0.0
    %195 = vmatprep.subr.mxu0 0.0
    %196 = vmatpush1.msra.mxu0 0.0
    %197 = vmatprep.subr.mxu0 0.0
    %198 = vmatpush1.msra.mxu0 0.0
    %199 = vmatprep.subr.mxu0 0.0
    %200 = vmatpush1.msra.mxu0 0.0
    %201 = vmatprep.subr.mxu0 0.0
    %202 = vmatpush1.msra.mxu0 0.0
    %203 = vmatprep.subr.mxu0 0.0
    %204 = vmatpush1.msra.mxu0 0.0
    %205 = vmatprep.subr.mxu0 0.0
    %206 = vmatpush1.msra.mxu0 0.0
    %207 = vmatprep.subr.mxu0 0.0
    %208 = vmatpush1.msra.mxu0 0.0
    %209 = vmatprep.subr.mxu0 0.0
    %210 = vmatpush1.msra.mxu0 0.0
    %211 = vmatprep.subr.mxu0 0.0
    %212 = vmatpush1.msra.mxu0 0.0
    %213 = vmatprep.subr.mxu0 0.0
    %214 = vmatpush1.msra.mxu0 0.0
    %215 = vmatprep.subr.mxu0 0.0
    %216 = vmatpush1.msra.mxu0 0.0
    %217 = vmatprep.subr.mxu0 0.0
    %218 = vmatpush1.msra.mxu0 0.0
    %219 = vmatprep.mubr.f32.mxu0 0.0
    %v220 = vand.u32 %v136, 4294901760
    %v221 = vsub.f32 %v136, %v220
    %v222 = vand.u32 %v221, 4294901760
    %v223 = vsub.f32 %v221, %v222
    %v224 = vand.u32 %v223, 4294901760
    %225 = vmatmul.mubr.f32.gmra.mrb[0].mxu0 %v224
    %v226 = vpop.f32.mrb[0].mxu0
    %v227 = vadd.f32 0.0, %v226
    %v228 = vpop.f32.mrb[0].mxu0
    %229 = vmatprep.mubr.f32.mxu0 0.0
    %v230 = vand.u32 %v139, 4294901760
    %v231 = vsub.f32 %v139, %v230
    %v232 = vand.u32 %v231, 4294901760
    %v233 = vsub.f32 %v231, %v232
    %v234 = vand.u32 %v233, 4294901760
    %235 = vmatmul.mubr.f32.gmra.mrb[0].mxu0 %v234
    %v236 = vpop.f32.mrb[0].mxu0
    %v237 = vadd.f32 0.0, %v236
    %v238 = vpop.f32.mrb[0].mxu0
    %239 = vmatprep.mubr.f32.mxu0 0.0
    %v240 = vand.u32 %v142, 4294901760
    %v241 = vsub.f32 %v142, %v240
    %v242 = vand.u32 %v241, 4294901760
    %v243 = vsub.f32 %v241, %v242
    %v244 = vand.u32 %v243, 4294901760
    %245 = vmatmul.mubr.f32.gmra.mrb[0].mxu0 %v244
    %v246 = vpop.f32.mrb[0].mxu0
    %v247 = vadd.f32 0.0, %v246
    %v248 = vpop.f32.mrb[0].mxu0
    %249 = vmatprep.mubr.f32.mxu0 0.0
    %v250 = vand.u32 %v145, 4294901760
    %v251 = vsub.f32 %v145, %v250
    %v252 = vand.u32 %v251, 4294901760
    %v253 = vsub.f32 %v251, %v252
    %v254 = vand.u32 %v253, 4294901760
    %255 = vmatmul.mubr.f32.gmra.mrb[0].mxu0 %v254
    %v256 = vpop.f32.mrb[0].mxu0
    %v257 = vadd.f32 0.0, %v256
    %v258 = vpop.f32.mrb[0].mxu0
    %259 = vdwg.mxu0
    %260 = vmatprep.subr.mxu0 0.0
    %v261 = vand.u32 %v104, 4294901760
    %v262 = vsub.f32 %v104, %v261
    %v263 = vand.u32 %v262, 4294901760
    %v264 = vsub.f32 %v262, %v263
    %v265 = vand.u32 %v264, 4294901760
    %266 = vmatpush1.msra.mxu0 %v265
    %267 = vmatprep.subr.mxu0 0.0
    %v268 = vand.u32 %v105, 4294901760
    %v269 = vsub.f32 %v105, %v268
    %v270 = vand.u32 %v269, 4294901760
    %v271 = vsub.f32 %v269, %v270
    %v272 = vand.u32 %v271, 4294901760
    %273 = vmatpush1.msra.mxu0 %v272
    %274 = vmatprep.subr.mxu0 0.0
    %v275 = vand.u32 %v106, 4294901760
    %v276 = vsub.f32 %v106, %v275
    %v277 = vand.u32 %v276, 4294901760
    %v278 = vsub.f32 %v276, %v277
    %v279 = vand.u32 %v278, 4294901760
    %280 = vmatpush1.msra.mxu0 %v279
    %281 = vmatprep.subr.mxu0 0.0
    %v282 = vand.u32 %v107, 4294901760
    %v283 = vsub.f32 %v107, %v282
    %v284 = vand.u32 %v283, 4294901760
    %v285 = vsub.f32 %v283, %v284
    %v286 = vand.u32 %v285, 4294901760
    %287 = vmatpush1.msra.mxu0 %v286
    %288 = vmatprep.subr.mxu0 0.0
    %v289 = vand.u32 %v108, 4294901760
    %v290 = vsub.f32 %v108, %v289
    %v291 = vand.u32 %v290, 4294901760
    %v292 = vsub.f32 %v290, %v291
    %v293 = vand.u32 %v292, 4294901760
    %294 = vmatpush1.msra.mxu0 %v293
    %295 = vmatprep.subr.mxu0 0.0
    %v296 = vand.u32 %v109, 4294901760
    %v297 = vsub.f32 %v109, %v296
    %v298 = vand.u32 %v297, 4294901760
    %v299 = vsub.f32 %v297, %v298
    %v300 = vand.u32 %v299, 4294901760
    %301 = vmatpush1.msra.mxu0 %v300
    %302 = vmatprep.subr.mxu0 0.0
    %v303 = vand.u32 %v110, 4294901760
    %v304 = vsub.f32 %v110, %v303
    %v305 = vand.u32 %v304, 4294901760
    %v306 = vsub.f32 %v304, %v305
    %v307 = vand.u32 %v306, 4294901760
    %308 = vmatpush1.msra.mxu0 %v307
    %309 = vmatprep.subr.mxu0 0.0
    %v310 = vand.u32 %v111, 4294901760
    %v311 = vsub.f32 %v111, %v310
    %v312 = vand.u32 %v311, 4294901760
    %v313 = vsub.f32 %v311, %v312
    %v314 = vand.u32 %v313, 4294901760
    %315 = vmatpush1.msra.mxu0 %v314
    %316 = vmatprep.subr.mxu0 0.0
    %317 = vmatpush1.msra.mxu0 0.0
    %318 = vmatprep.subr.mxu0 0.0
    %319 = vmatpush1.msra.mxu0 0.0
    %320 = vmatprep.subr.mxu0 0.0
    %321 = vmatpush1.msra.mxu0 0.0
    %322 = vmatprep.subr.mxu0 0.0
    %323 = vmatpush1.msra.mxu0 0.0
    %324 = vmatprep.subr.mxu0 0.0
    %325 = vmatpush1.msra.mxu0 0.0
    %326 = vmatprep.subr.mxu0 0.0
    %327 = vmatpush1.msra.mxu0 0.0
    %328 = vmatprep.subr.mxu0 0.0
    %329 = vmatpush1.msra.mxu0 0.0
    %330 = vmatprep.subr.mxu0 0.0
    %331 = vmatpush1.msra.mxu0 0.0
    %332 = vmatprep.subr.mxu0 0.0
    %333 = vmatpush1.msra.mxu0 0.0
    %334 = vmatprep.subr.mxu0 0.0
    %335 = vmatpush1.msra.mxu0 0.0
    %336 = vmatprep.subr.mxu0 0.0
    %337 = vmatpush1.msra.mxu0 0.0
    %338 = vmatprep.subr.mxu0 0.0
    %339 = vmatpush1.msra.mxu0 0.0
    %340 = vmatprep.subr.mxu0 0.0
    %341 = vmatpush1.msra.mxu0 0.0
    %342 = vmatprep.subr.mxu0 0.0
    %343 = vmatpush1.msra.mxu0 0.0
    %344 = vmatprep.subr.mxu0 0.0
    %345 = vmatpush1.msra.mxu0 0.0
    %346 = vmatprep.subr.mxu0 0.0
    %347 = vmatpush1.msra.mxu0 0.0
    %348 = vmatprep.subr.mxu0 0.0
    %349 = vmatpush1.msra.mxu0 0.0
    %350 = vmatprep.subr.mxu0 0.0
    %351 = vmatpush1.msra.mxu0 0.0
    %352 = vmatprep.subr.mxu0 0.0
    %353 = vmatpush1.msra.mxu0 0.0
    %354 = vmatprep.subr.mxu0 0.0
    %355 = vmatpush1.msra.mxu0 0.0
    %356 = vmatprep.subr.mxu0 0.0
    %357 = vmatpush1.msra.mxu0 0.0
    %358 = vmatprep.subr.mxu0 0.0
    %359 = vmatpush1.msra.mxu0 0.0
    %360 = vmatprep.subr.mxu0 0.0
    %361 = vmatpush1.msra.mxu0 0.0
    %362 = vmatprep.subr.mxu0 0.0
    %363 = vmatpush1.msra.mxu0 0.0
    %364 = vmatprep.mubr.f32.mxu0 0.0
    %v365 = vand.u32 %v136, 4294901760
    %366 = vmatmul.mubr.f32.gmra.mrb[0].mxu0 %v365
    %v367 = vpop.f32.mrb[0].mxu0
    %v368 = vadd.f32 %v227, %v367
    %v369 = vpop.f32.mrb[0].mxu0
    %370 = vmatprep.mubr.f32.mxu0 0.0
    %v371 = vand.u32 %v139, 4294901760
    %372 = vmatmul.mubr.f32.gmra.mrb[0].mxu0 %v371
    %v373 = vpop.f32.mrb[0].mxu0
    %v374 = vadd.f32 %v237, %v373
    %v375 = vpop.f32.mrb[0].mxu0
    %376 = vmatprep.mubr.f32.mxu0 0.0
    %v377 = vand.u32 %v142, 4294901760
    %378 = vmatmul.mubr.f32.gmra.mrb[0].mxu0 %v377
    %v379 = vpop.f32.mrb[0].mxu0
    %v380 = vadd.f32 %v247, %v379
    %v381 = vpop.f32.mrb[0].mxu0
    %382 = vmatprep.mubr.f32.mxu0 0.0
    %v383 = vand.u32 %v145, 4294901760
    %384 = vmatmul.mubr.f32.gmra.mrb[0].mxu0 %v383
    %v385 = vpop.f32.mrb[0].mxu0
    %v386 = vadd.f32 %v257, %v385
    %v387 = vpop.f32.mrb[0].mxu0
    %388 = vdwg.mxu0
    %389 = vmatprep.subr.mxu0 0.0
    %v390 = vand.u32 %v104, 4294901760
    %v391 = vsub.f32 %v104, %v390
    %392 = vmatpush1.msra.mxu0 %v391
    %393 = vmatprep.subr.mxu0 0.0
    %v394 = vand.u32 %v105, 4294901760
    %v395 = vsub.f32 %v105, %v394
    %396 = vmatpush1.msra.mxu0 %v395
    %397 = vmatprep.subr.mxu0 0.0
    %v398 = vand.u32 %v106, 4294901760
    %v399 = vsub.f32 %v106, %v398
    %400 = vmatpush1.msra.mxu0 %v399
    %401 = vmatprep.subr.mxu0 0.0
    %v402 = vand.u32 %v107, 4294901760
    %v403 = vsub.f32 %v107, %v402
    %404 = vmatpush1.msra.mxu0 %v403
    %405 = vmatprep.subr.mxu0 0.0
    %v406 = vand.u32 %v108, 4294901760
    %v407 = vsub.f32 %v108, %v406
    %408 = vmatpush1.msra.mxu0 %v407
    %409 = vmatprep.subr.mxu0 0.0
    %v410 = vand.u32 %v109, 4294901760
    %v411 = vsub.f32 %v109, %v410
    %412 = vmatpush1.msra.mxu0 %v411
    %413 = vmatprep.subr.mxu0 0.0
    %v414 = vand.u32 %v110, 4294901760
    %v415 = vsub.f32 %v110, %v414
    %416 = vmatpush1.msra.mxu0 %v415
    %417 = vmatprep.subr.mxu0 0.0
    %v418 = vand.u32 %v111, 4294901760
    %v419 = vsub.f32 %v111, %v418
    %420 = vmatpush1.msra.mxu0 %v419
    %421 = vmatprep.subr.mxu0 0.0
    %422 = vmatpush1.msra.mxu0 0.0
    %423 = vmatprep.subr.mxu0 0.0
    %424 = vmatpush1.msra.mxu0 0.0
    %425 = vmatprep.subr.mxu0 0.0
    %426 = vmatpush1.msra.mxu0 0.0
    %427 = vmatprep.subr.mxu0 0.0
    %428 = vmatpush1.msra.mxu0 0.0
    %429 = vmatprep.subr.mxu0 0.0
    %430 = vmatpush1.msra.mxu0 0.0
    %431 = vmatprep.subr.mxu0 0.0
    %432 = vmatpush1.msra.mxu0 0.0
    %433 = vmatprep.subr.mxu0 0.0
    %434 = vmatpush1.msra.mxu0 0.0
    %435 = vmatprep.subr.mxu0 0.0
    %436 = vmatpush1.msra.mxu0 0.0
    %437 = vmatprep.subr.mxu0 0.0
    %438 = vmatpush1.msra.mxu0 0.0
    %439 = vmatprep.subr.mxu0 0.0
    %440 = vmatpush1.msra.mxu0 0.0
    %441 = vmatprep.subr.mxu0 0.0
    %442 = vmatpush1.msra.mxu0 0.0
    %443 = vmatprep.subr.mxu0 0.0
    %444 = vmatpush1.msra.mxu0 0.0
    %445 = vmatprep.subr.mxu0 0.0
    %446 = vmatpush1.msra.mxu0 0.0
    %447 = vmatprep.subr.mxu0 0.0
    %448 = vmatpush1.msra.mxu0 0.0
    %449 = vmatprep.subr.mxu0 0.0
    %450 = vmatpush1.msra.mxu0 0.0
    %451 = vmatprep.subr.mxu0 0.0
    %452 = vmatpush1.msra.mxu0 0.0
    %453 = vmatprep.subr.mxu0 0.0
    %454 = vmatpush1.msra.mxu0 0.0
    %455 = vmatprep.subr.mxu0 0.0
    %456 = vmatpush1.msra.mxu0 0.0
    %457 = vmatprep.subr.mxu0 0.0
    %458 = vmatpush1.msra.mxu0 0.0
    %459 = vmatprep.subr.mxu0 0.0
    %460 = vmatpush1.msra.mxu0 0.0
    %461 = vmatprep.subr.mxu0 0.0
    %462 = vmatpush1.msra.mxu0 0.0
    %463 = vmatprep.subr.mxu0 0.0
    %464 = vmatpush1.msra.mxu0 0.0
    %465 = vmatprep.subr.mxu0 0.0
    %466 = vmatpush1.msra.mxu0 0.0
    %467 = vmatprep.subr.mxu0 0.0
    %468 = vmatpush1.msra.mxu0 0.0
    %469 = vmatprep.mubr.f32.mxu0 0.0
    %v470 = vand.u32 %v136, 4294901760
    %v471 = vsub.f32 %v136, %v470
    %472 = vmatmul.mubr.f32.gmra.mrb[0].mxu0 %v471
    %v473 = vpop.f32.mrb[0].mxu0
    %v474 = vadd.f32 %v368, %v473
    %v475 = vpop.f32.mrb[0].mxu0
    %476 = vmatprep.mubr.f32.mxu0 0.0
    %v477 = vand.u32 %v139, 4294901760
    %v478 = vsub.f32 %v139, %v477
    %479 = vmatmul.mubr.f32.gmra.mrb[0].mxu0 %v478
    %v480 = vpop.f32.mrb[0].mxu0
    %v481 = vadd.f32 %v374, %v480
    %v482 = vpop.f32.mrb[0].mxu0
    %483 = vmatprep.mubr.f32.mxu0 0.0
    %v484 = vand.u32 %v142, 4294901760
    %v485 = vsub.f32 %v142, %v484
    %486 = vmatmul.mubr.f32.gmra.mrb[0].mxu0 %v485
    %v487 = vpop.f32.mrb[0].mxu0
    %v488 = vadd.f32 %v380, %v487
    %v489 = vpop.f32.mrb[0].mxu0
    %490 = vmatprep.mubr.f32.mxu0 0.0
    %v491 = vand.u32 %v145, 4294901760
    %v492 = vsub.f32 %v145, %v491
    %493 = vmatmul.mubr.f32.gmra.mrb[0].mxu0 %v492
    %v494 = vpop.f32.mrb[0].mxu0
    %v495 = vadd.f32 %v386, %v494
    %v496 = vpop.f32.mrb[0].mxu0
    %497 = vdwg.mxu0
    %498 = vmatprep.subr.mxu0 0.0
    %v499 = vand.u32 %v104, 4294901760
    %500 = vmatpush1.msra.mxu0 %v499
    %501 = vmatprep.subr.mxu0 0.0
    %v502 = vand.u32 %v105, 4294901760
    %503 = vmatpush1.msra.mxu0 %v502
    %504 = vmatprep.subr.mxu0 0.0
    %v505 = vand.u32 %v106, 4294901760
    %506 = vmatpush1.msra.mxu0 %v505
    %507 = vmatprep.subr.mxu0 0.0
    %v508 = vand.u32 %v107, 4294901760
    %509 = vmatpush1.msra.mxu0 %v508
    %510 = vmatprep.subr.mxu0 0.0
    %v511 = vand.u32 %v108, 4294901760
    %512 = vmatpush1.msra.mxu0 %v511
    %513 = vmatprep.subr.mxu0 0.0
    %v514 = vand.u32 %v109, 4294901760
    %515 = vmatpush1.msra.mxu0 %v514
    %516 = vmatprep.subr.mxu0 0.0
    %v517 = vand.u32 %v110, 4294901760
    %518 = vmatpush1.msra.mxu0 %v517
    %519 = vmatprep.subr.mxu0 0.0
    %v520 = vand.u32 %v111, 4294901760
    %521 = vmatpush1.msra.mxu0 %v520
    %522 = vmatprep.subr.mxu0 0.0
    %523 = vmatpush1.msra.mxu0 0.0
    %524 = vmatprep.subr.mxu0 0.0
    %525 = vmatpush1.msra.mxu0 0.0
    %526 = vmatprep.subr.mxu0 0.0
    %527 = vmatpush1.msra.mxu0 0.0
    %528 = vmatprep.subr.mxu0 0.0
    %529 = vmatpush1.msra.mxu0 0.0
    %530 = vmatprep.subr.mxu0 0.0
    %531 = vmatpush1.msra.mxu0 0.0
    %532 = vmatprep.subr.mxu0 0.0
    %533 = vmatpush1.msra.mxu0 0.0
    %534 = vmatprep.subr.mxu0 0.0
    %535 = vmatpush1.msra.mxu0 0.0
    %536 = vmatprep.subr.mxu0 0.0
    %537 = vmatpush1.msra.mxu0 0.0
    %538 = vmatprep.subr.mxu0 0.0
    %539 = vmatpush1.msra.mxu0 0.0
    %540 = vmatprep.subr.mxu0 0.0
    %541 = vmatpush1.msra.mxu0 0.0
    %542 = vmatprep.subr.mxu0 0.0
    %543 = vmatpush1.msra.mxu0 0.0
    %544 = vmatprep.subr.mxu0 0.0
    %545 = vmatpush1.msra.mxu0 0.0
    %546 = vmatprep.subr.mxu0 0.0
    %547 = vmatpush1.msra.mxu0 0.0
    %548 = vmatprep.subr.mxu0 0.0
    %549 = vmatpush1.msra.mxu0 0.0
    %550 = vmatprep.subr.mxu0 0.0
    %551 = vmatpush1.msra.mxu0 0.0
    %552 = vmatprep.subr.mxu0 0.0
    %553 = vmatpush1.msra.mxu0 0.0
    %554 = vmatprep.subr.mxu0 0.0
    %555 = vmatpush1.msra.mxu0 0.0
    %556 = vmatprep.subr.mxu0 0.0
    %557 = vmatpush1.msra.mxu0 0.0
    %558 = vmatprep.subr.mxu0 0.0
    %559 = vmatpush1.msra.mxu0 0.0
    %560 = vmatprep.subr.mxu0 0.0
    %561 = vmatpush1.msra.mxu0 0.0
    %562 = vmatprep.subr.mxu0 0.0
    %563 = vmatpush1.msra.mxu0 0.0
    %564 = vmatprep.subr.mxu0 0.0
    %565 = vmatpush1.msra.mxu0 0.0
    %566 = vmatprep.subr.mxu0 0.0
    %567 = vmatpush1.msra.mxu0 0.0
    %568 = vmatprep.subr.mxu0 0.0
    %569 = vmatpush1.msra.mxu0 0.0
    %570 = vmatprep.mubr.f32.mxu0 0.0
    %v571 = vand.u32 %v136, 4294901760
    %v572 = vsub.f32 %v136, %v571
    %v573 = vand.u32 %v572, 4294901760
    %574 = vmatmul.mubr.f32.gmra.mrb[0].mxu0 %v573
    %v575 = vpop.f32.mrb[0].mxu0
    %v576 = vadd.f32 %v474, %v575
    %v577 = vpop.f32.mrb[0].mxu0
    %578 = vmatprep.mubr.f32.mxu0 0.0
    %v579 = vand.u32 %v139, 4294901760
    %v580 = vsub.f32 %v139, %v579
    %v581 = vand.u32 %v580, 4294901760
    %582 = vmatmul.mubr.f32.gmra.mrb[0].mxu0 %v581
    %v583 = vpop.f32.mrb[0].mxu0
    %v584 = vadd.f32 %v481, %v583
    %v585 = vpop.f32.mrb[0].mxu0
    %586 = vmatprep.mubr.f32.mxu0 0.0
    %v587 = vand.u32 %v142, 4294901760
    %v588 = vsub.f32 %v142, %v587
    %v589 = vand.u32 %v588, 4294901760
    %590 = vmatmul.mubr.f32.gmra.mrb[0].mxu0 %v589
    %v591 = vpop.f32.mrb[0].mxu0
    %v592 = vadd.f32 %v488, %v591
    %v593 = vpop.f32.mrb[0].mxu0
    %594 = vmatprep.mubr.f32.mxu0 0.0
    %v595 = vand.u32 %v145, 4294901760
    %v596 = vsub.f32 %v145, %v595
    %v597 = vand.u32 %v596, 4294901760
    %598 = vmatmul.mubr.f32.gmra.mrb[0].mxu0 %v597
    %v599 = vpop.f32.mrb[0].mxu0
    %v600 = vadd.f32 %v495, %v599
    %v601 = vpop.f32.mrb[0].mxu0
    %602 = vdwg.mxu0
    %603 = vmatprep.subr.mxu0 0.0
    %v604 = vand.u32 %v104, 4294901760
    %v605 = vsub.f32 %v104, %v604
    %v606 = vand.u32 %v605, 4294901760
    %607 = vmatpush1.msra.mxu0 %v606
    %608 = vmatprep.subr.mxu0 0.0
    %v609 = vand.u32 %v105, 4294901760
    %v610 = vsub.f32 %v105, %v609
    %v611 = vand.u32 %v610, 4294901760
    %612 = vmatpush1.msra.mxu0 %v611
    %613 = vmatprep.subr.mxu0 0.0
    %v614 = vand.u32 %v106, 4294901760
    %v615 = vsub.f32 %v106, %v614
    %v616 = vand.u32 %v615, 4294901760
    %617 = vmatpush1.msra.mxu0 %v616
    %618 = vmatprep.subr.mxu0 0.0
    %v619 = vand.u32 %v107, 4294901760
    %v620 = vsub.f32 %v107, %v619
    %v621 = vand.u32 %v620, 4294901760
    %622 = vmatpush1.msra.mxu0 %v621
    %623 = vmatprep.subr.mxu0 0.0
    %v624 = vand.u32 %v108, 4294901760
    %v625 = vsub.f32 %v108, %v624
    %v626 = vand.u32 %v625, 4294901760
    %627 = vmatpush1.msra.mxu0 %v626
    %628 = vmatprep.subr.mxu0 0.0
    %v629 = vand.u32 %v109, 4294901760
    %v630 = vsub.f32 %v109, %v629
    %v631 = vand.u32 %v630, 4294901760
    %632 = vmatpush1.msra.mxu0 %v631
    %633 = vmatprep.subr.mxu0 0.0
    %v634 = vand.u32 %v110, 4294901760
    %v635 = vsub.f32 %v110, %v634
    %v636 = vand.u32 %v635, 4294901760
    %637 = vmatpush1.msra.mxu0 %v636
    %638 = vmatprep.subr.mxu0 0.0
    %v639 = vand.u32 %v111, 4294901760
    %v640 = vsub.f32 %v111, %v639
    %v641 = vand.u32 %v640, 4294901760
    %642 = vmatpush1.msra.mxu0 %v641
    %643 = vmatprep.subr.mxu0 0.0
    %644 = vmatpush1.msra.mxu0 0.0
    %645 = vmatprep.subr.mxu0 0.0
    %646 = vmatpush1.msra.mxu0 0.0
    %647 = vmatprep.subr.mxu0 0.0
    %648 = vmatpush1.msra.mxu0 0.0
    %649 = vmatprep.subr.mxu0 0.0
    %650 = vmatpush1.msra.mxu0 0.0
    %651 = vmatprep.subr.mxu0 0.0
    %652 = vmatpush1.msra.mxu0 0.0
    %653 = vmatprep.subr.mxu0 0.0
    %654 = vmatpush1.msra.mxu0 0.0
    %655 = vmatprep.subr.mxu0 0.0
    %656 = vmatpush1.msra.mxu0 0.0
    %657 = vmatprep.subr.mxu0 0.0
    %658 = vmatpush1.msra.mxu0 0.0
    %659 = vmatprep.subr.mxu0 0.0
    %660 = vmatpush1.msra.mxu0 0.0
    %661 = vmatprep.subr.mxu0 0.0
    %662 = vmatpush1.msra.mxu0 0.0
    %663 = vmatprep.subr.mxu0 0.0
    %664 = vmatpush1.msra.mxu0 0.0
    %665 = vmatprep.subr.mxu0 0.0
    %666 = vmatpush1.msra.mxu0 0.0
    %667 = vmatprep.subr.mxu0 0.0
    %668 = vmatpush1.msra.mxu0 0.0
    %669 = vmatprep.subr.mxu0 0.0
    %670 = vmatpush1.msra.mxu0 0.0
    %671 = vmatprep.subr.mxu0 0.0
    %672 = vmatpush1.msra.mxu0 0.0
    %673 = vmatprep.subr.mxu0 0.0
    %674 = vmatpush1.msra.mxu0 0.0
    %675 = vmatprep.subr.mxu0 0.0
    %676 = vmatpush1.msra.mxu0 0.0
    %677 = vmatprep.subr.mxu0 0.0
    %678 = vmatpush1.msra.mxu0 0.0
    %679 = vmatprep.subr.mxu0 0.0
    %680 = vmatpush1.msra.mxu0 0.0
    %681 = vmatprep.subr.mxu0 0.0
    %682 = vmatpush1.msra.mxu0 0.0
    %683 = vmatprep.subr.mxu0 0.0
    %684 = vmatpush1.msra.mxu0 0.0
    %685 = vmatprep.subr.mxu0 0.0
    %686 = vmatpush1.msra.mxu0 0.0
    %687 = vmatprep.subr.mxu0 0.0
    %688 = vmatpush1.msra.mxu0 0.0
    %689 = vmatprep.subr.mxu0 0.0
    %690 = vmatpush1.msra.mxu0 0.0
    %691 = vmatprep.mubr.f32.mxu0 0.0
    %v692 = vand.u32 %v136, 4294901760
    %693 = vmatmul.mubr.f32.gmra.mrb[0].mxu0 %v692
    %v694 = vpop.f32.mrb[0].mxu0
    %v695 = vadd.f32 %v576, %v694
    %v696 = vpop.f32.mrb[0].mxu0
    %697 = vmatprep.mubr.f32.mxu0 0.0
    %v698 = vand.u32 %v139, 4294901760
    %699 = vmatmul.mubr.f32.gmra.mrb[0].mxu0 %v698
    %v700 = vpop.f32.mrb[0].mxu0
    %v701 = vadd.f32 %v584, %v700
    %v702 = vpop.f32.mrb[0].mxu0
    %703 = vmatprep.mubr.f32.mxu0 0.0
    %v704 = vand.u32 %v142, 4294901760
    %705 = vmatmul.mubr.f32.gmra.mrb[0].mxu0 %v704
    %v706 = vpop.f32.mrb[0].mxu0
    %v707 = vadd.f32 %v592, %v706
    %v708 = vpop.f32.mrb[0].mxu0
    %709 = vmatprep.mubr.f32.mxu0 0.0
    %v710 = vand.u32 %v145, 4294901760
    %711 = vmatmul.mubr.f32.gmra.mrb[0].mxu0 %v710
    %v712 = vpop.f32.mrb[0].mxu0
    %v713 = vadd.f32 %v600, %v712
    %v714 = vpop.f32.mrb[0].mxu0
    %715 = vdwg.mxu0
    %716 = vmatprep.subr.mxu0 0.0
    %v717 = vand.u32 %v104, 4294901760
    %718 = vmatpush1.msra.mxu0 %v717
    %719 = vmatprep.subr.mxu0 0.0
    %v720 = vand.u32 %v105, 4294901760
    %721 = vmatpush1.msra.mxu0 %v720
    %722 = vmatprep.subr.mxu0 0.0
    %v723 = vand.u32 %v106, 4294901760
    %724 = vmatpush1.msra.mxu0 %v723
    %725 = vmatprep.subr.mxu0 0.0
    %v726 = vand.u32 %v107, 4294901760
    %727 = vmatpush1.msra.mxu0 %v726
    %728 = vmatprep.subr.mxu0 0.0
    %v729 = vand.u32 %v108, 4294901760
    %730 = vmatpush1.msra.mxu0 %v729
    %731 = vmatprep.subr.mxu0 0.0
    %v732 = vand.u32 %v109, 4294901760
    %733 = vmatpush1.msra.mxu0 %v732
    %734 = vmatprep.subr.mxu0 0.0
    %v735 = vand.u32 %v110, 4294901760
    %736 = vmatpush1.msra.mxu0 %v735
    %737 = vmatprep.subr.mxu0 0.0
    %v738 = vand.u32 %v111, 4294901760
    %739 = vmatpush1.msra.mxu0 %v738
    %740 = vmatprep.subr.mxu0 0.0
    %741 = vmatpush1.msra.mxu0 0.0
    %742 = vmatprep.subr.mxu0 0.0
    %743 = vmatpush1.msra.mxu0 0.0
    %744 = vmatprep.subr.mxu0 0.0
    %745 = vmatpush1.msra.mxu0 0.0
    %746 = vmatprep.subr.mxu0 0.0
    %747 = vmatpush1.msra.mxu0 0.0
    %748 = vmatprep.subr.mxu0 0.0
    %749 = vmatpush1.msra.mxu0 0.0
    %750 = vmatprep.subr.mxu0 0.0
    %751 = vmatpush1.msra.mxu0 0.0
    %752 = vmatprep.subr.mxu0 0.0
    %753 = vmatpush1.msra.mxu0 0.0
    %754 = vmatprep.subr.mxu0 0.0
    %755 = vmatpush1.msra.mxu0 0.0
    %756 = vmatprep.subr.mxu0 0.0
    %757 = vmatpush1.msra.mxu0 0.0
    %758 = vmatprep.subr.mxu0 0.0
    %759 = vmatpush1.msra.mxu0 0.0
    %760 = vmatprep.subr.mxu0 0.0
    %761 = vmatpush1.msra.mxu0 0.0
    %762 = vmatprep.subr.mxu0 0.0
    %763 = vmatpush1.msra.mxu0 0.0
    %764 = vmatprep.subr.mxu0 0.0
    %765 = vmatpush1.msra.mxu0 0.0
    %766 = vmatprep.subr.mxu0 0.0
    %767 = vmatpush1.msra.mxu0 0.0
    %768 = vmatprep.subr.mxu0 0.0
    %769 = vmatpush1.msra.mxu0 0.0
    %770 = vmatprep.subr.mxu0 0.0
    %771 = vmatpush1.msra.mxu0 0.0
    %772 = vmatprep.subr.mxu0 0.0
    %773 = vmatpush1.msra.mxu0 0.0
    %774 = vmatprep.subr.mxu0 0.0
    %775 = vmatpush1.msra.mxu0 0.0
    %776 = vmatprep.subr.mxu0 0.0
    %777 = vmatpush1.msra.mxu0 0.0
    %778 = vmatprep.subr.mxu0 0.0
    %779 = vmatpush1.msra.mxu0 0.0
    %780 = vmatprep.subr.mxu0 0.0
    %781 = vmatpush1.msra.mxu0 0.0
    %782 = vmatprep.subr.mxu0 0.0
    %783 = vmatpush1.msra.mxu0 0.0
    %784 = vmatprep.subr.mxu0 0.0
    %785 = vmatpush1.msra.mxu0 0.0
    %786 = vmatprep.subr.mxu0 0.0
    %787 = vmatpush1.msra.mxu0 0.0
    %788 = vmatprep.mubr.f32.mxu0 0.0
    %v789 = vand.u32 %v136, 4294901760
    %790 = vmatmul.mubr.f32.gmra.mrb[0].mxu0 %v789
    %v791 = vpop.f32.mrb[0].mxu0
    %v792 = vadd.f32 %v695, %v791
    %v793 = vpop.f32.mrb[0].mxu0
    %794 = vmatprep.mubr.f32.mxu0 0.0
    %v795 = vand.u32 %v139, 4294901760
    %796 = vmatmul.mubr.f32.gmra.mrb[0].mxu0 %v795
    %v797 = vpop.f32.mrb[0].mxu0
    %v798 = vadd.f32 %v701, %v797
    %v799 = vpop.f32.mrb[0].mxu0
    %800 = vmatprep.mubr.f32.mxu0 0.0
    %v801 = vand.u32 %v142, 4294901760
    %802 = vmatmul.mubr.f32.gmra.mrb[0].mxu0 %v801
    %v803 = vpop.f32.mrb[0].mxu0
    %v804 = vadd.f32 %v707, %v803
    %v805 = vpop.f32.mrb[0].mxu0
    %806 = vmatprep.mubr.f32.mxu0 0.0
    %v807 = vand.u32 %v145, 4294901760
    %808 = vmatmul.mubr.f32.gmra.mrb[0].mxu0 %v807
    %v809 = vpop.f32.mrb[0].mxu0
    %v810 = vadd.f32 %v713, %v809
    %v811 = vpop.f32.mrb[0].mxu0
    %812 = vdwg.mxu0
    %vm813 = vcmask 392192
    %v815 = vsel %vm813, %v69, 0
    %v818 = vsel %vm813, %v70, 0
    %v821 = vsel %vm813, %v71, 0
    %v824 = vsel %vm813, %v72, 0
    %826 = vmatprep.subr.mxu0 0.0
    %v827 = vand.u32 %v128, 4294901760
    %828 = vmatpush1.msra.mxu0 %v827
    %829 = vmatprep.subr.mxu0 0.0
    %v830 = vand.u32 %v129, 4294901760
    %831 = vmatpush1.msra.mxu0 %v830
    %832 = vmatprep.subr.mxu0 0.0
    %v833 = vand.u32 %v130, 4294901760
    %834 = vmatpush1.msra.mxu0 %v833
    %835 = vmatprep.subr.mxu0 0.0
    %v836 = vand.u32 %v131, 4294901760
    %837 = vmatpush1.msra.mxu0 %v836
    %838 = vmatprep.subr.mxu0 0.0
    %v839 = vand.u32 %v132, 4294901760
    %840 = vmatpush1.msra.mxu0 %v839
    %841 = vmatprep.subr.mxu0 0.0
    %v842 = vand.u32 %v133, 4294901760
    %843 = vmatpush1.msra.mxu0 %v842
    %844 = vmatprep.subr.mxu0 0.0
    %845 = vmatpush1.msra.mxu0 0.0
    %846 = vmatprep.subr.mxu0 0.0
    %847 = vmatpush1.msra.mxu0 0.0
    %848 = vmatprep.subr.mxu0 0.0
    %849 = vmatpush1.msra.mxu0 0.0
    %850 = vmatprep.subr.mxu0 0.0
    %851 = vmatpush1.msra.mxu0 0.0
    %852 = vmatprep.subr.mxu0 0.0
    %853 = vmatpush1.msra.mxu0 0.0
    %854 = vmatprep.subr.mxu0 0.0
    %855 = vmatpush1.msra.mxu0 0.0
    %856 = vmatprep.subr.mxu0 0.0
    %857 = vmatpush1.msra.mxu0 0.0
    %858 = vmatprep.subr.mxu0 0.0
    %859 = vmatpush1.msra.mxu0 0.0
    %860 = vmatprep.subr.mxu0 0.0
    %861 = vmatpush1.msra.mxu0 0.0
    %862 = vmatprep.subr.mxu0 0.0
    %863 = vmatpush1.msra.mxu0 0.0
    %864 = vmatprep.subr.mxu0 0.0
    %865 = vmatpush1.msra.mxu0 0.0
    %866 = vmatprep.subr.mxu0 0.0
    %867 = vmatpush1.msra.mxu0 0.0
    %868 = vmatprep.subr.mxu0 0.0
    %869 = vmatpush1.msra.mxu0 0.0
    %870 = vmatprep.subr.mxu0 0.0
    %871 = vmatpush1.msra.mxu0 0.0
    %872 = vmatprep.subr.mxu0 0.0
    %873 = vmatpush1.msra.mxu0 0.0
    %874 = vmatprep.subr.mxu0 0.0
    %875 = vmatpush1.msra.mxu0 0.0
    %876 = vmatprep.subr.mxu0 0.0
    %877 = vmatpush1.msra.mxu0 0.0
    %878 = vmatprep.subr.mxu0 0.0
    %879 = vmatpush1.msra.mxu0 0.0
    %880 = vmatprep.subr.mxu0 0.0
    %881 = vmatpush1.msra.mxu0 0.0
    %882 = vmatprep.subr.mxu0 0.0
    %883 = vmatpush1.msra.mxu0 0.0
    %884 = vmatprep.subr.mxu0 0.0
    %885 = vmatpush1.msra.mxu0 0.0
    %886 = vmatprep.subr.mxu0 0.0
    %887 = vmatpush1.msra.mxu0 0.0
    %888 = vmatprep.subr.mxu0 0.0
    %889 = vmatpush1.msra.mxu0 0.0
    %890 = vmatprep.subr.mxu0 0.0
    %891 = vmatpush1.msra.mxu0 0.0
    %892 = vmatprep.subr.mxu0 0.0
    %893 = vmatpush1.msra.mxu0 0.0
    %894 = vmatprep.subr.mxu0 0.0
    %895 = vmatpush1.msra.mxu0 0.0
    %896 = vmatprep.mubr.f32.mxu0 0.0
    %v897 = vand.u32 %v815, 4294901760
    %v898 = vsub.f32 %v815, %v897
    %v899 = vand.u32 %v898, 4294901760
    %v900 = vsub.f32 %v898, %v899
    %v901 = vand.u32 %v900, 4294901760
    %902 = vmatmul.mubr.f32.gmra.mrb[0].mxu0 %v901
    %v903 = vpop.f32.mrb[0].mxu0
    %v904 = vadd.f32 0.0, %v903
    %v905 = vpop.f32.mrb[0].mxu0
    %906 = vmatprep.mubr.f32.mxu0 0.0
    %v907 = vand.u32 %v818, 4294901760
    %v908 = vsub.f32 %v818, %v907
    %v909 = vand.u32 %v908, 4294901760
    %v910 = vsub.f32 %v908, %v909
    %v911 = vand.u32 %v910, 4294901760
    %912 = vmatmul.mubr.f32.gmra.mrb[0].mxu0 %v911
    %v913 = vpop.f32.mrb[0].mxu0
    %v914 = vadd.f32 0.0, %v913
    %v915 = vpop.f32.mrb[0].mxu0
    %916 = vmatprep.mubr.f32.mxu0 0.0
    %v917 = vand.u32 %v821, 4294901760
    %v918 = vsub.f32 %v821, %v917
    %v919 = vand.u32 %v918, 4294901760
    %v920 = vsub.f32 %v918, %v919
    %v921 = vand.u32 %v920, 4294901760
    %922 = vmatmul.mubr.f32.gmra.mrb[0].mxu0 %v921
    %v923 = vpop.f32.mrb[0].mxu0
    %v924 = vadd.f32 0.0, %v923
    %v925 = vpop.f32.mrb[0].mxu0
    %926 = vmatprep.mubr.f32.mxu0 0.0
    %v927 = vand.u32 %v824, 4294901760
    %v928 = vsub.f32 %v824, %v927
    %v929 = vand.u32 %v928, 4294901760
    %v930 = vsub.f32 %v928, %v929
    %v931 = vand.u32 %v930, 4294901760
    %932 = vmatmul.mubr.f32.gmra.mrb[0].mxu0 %v931
    %v933 = vpop.f32.mrb[0].mxu0
    %v934 = vadd.f32 0.0, %v933
    %v935 = vpop.f32.mrb[0].mxu0
    %936 = vdwg.mxu0
    %937 = vmatprep.subr.mxu0 0.0
    %v938 = vand.u32 %v128, 4294901760
    %v939 = vsub.f32 %v128, %v938
    %v940 = vand.u32 %v939, 4294901760
    %v941 = vsub.f32 %v939, %v940
    %v942 = vand.u32 %v941, 4294901760
    %943 = vmatpush1.msra.mxu0 %v942
    %944 = vmatprep.subr.mxu0 0.0
    %v945 = vand.u32 %v129, 4294901760
    %v946 = vsub.f32 %v129, %v945
    %v947 = vand.u32 %v946, 4294901760
    %v948 = vsub.f32 %v946, %v947
    %v949 = vand.u32 %v948, 4294901760
    %950 = vmatpush1.msra.mxu0 %v949
    %951 = vmatprep.subr.mxu0 0.0
    %v952 = vand.u32 %v130, 4294901760
    %v953 = vsub.f32 %v130, %v952
    %v954 = vand.u32 %v953, 4294901760
    %v955 = vsub.f32 %v953, %v954
    %v956 = vand.u32 %v955, 4294901760
    %957 = vmatpush1.msra.mxu0 %v956
    %958 = vmatprep.subr.mxu0 0.0
    %v959 = vand.u32 %v131, 4294901760
    %v960 = vsub.f32 %v131, %v959
    %v961 = vand.u32 %v960, 4294901760
    %v962 = vsub.f32 %v960, %v961
    %v963 = vand.u32 %v962, 4294901760
    %964 = vmatpush1.msra.mxu0 %v963
    %965 = vmatprep.subr.mxu0 0.0
    %v966 = vand.u32 %v132, 4294901760
    %v967 = vsub.f32 %v132, %v966
    %v968 = vand.u32 %v967, 4294901760
    %v969 = vsub.f32 %v967, %v968
    %v970 = vand.u32 %v969, 4294901760
    %971 = vmatpush1.msra.mxu0 %v970
    %972 = vmatprep.subr.mxu0 0.0
    %v973 = vand.u32 %v133, 4294901760
    %v974 = vsub.f32 %v133, %v973
    %v975 = vand.u32 %v974, 4294901760
    %v976 = vsub.f32 %v974, %v975
    %v977 = vand.u32 %v976, 4294901760
    %978 = vmatpush1.msra.mxu0 %v977
    %979 = vmatprep.subr.mxu0 0.0
    %980 = vmatpush1.msra.mxu0 0.0
    %981 = vmatprep.subr.mxu0 0.0
    %982 = vmatpush1.msra.mxu0 0.0
    %983 = vmatprep.subr.mxu0 0.0
    %984 = vmatpush1.msra.mxu0 0.0
    %985 = vmatprep.subr.mxu0 0.0
    %986 = vmatpush1.msra.mxu0 0.0
    %987 = vmatprep.subr.mxu0 0.0
    %988 = vmatpush1.msra.mxu0 0.0
    %989 = vmatprep.subr.mxu0 0.0
    %990 = vmatpush1.msra.mxu0 0.0
    %991 = vmatprep.subr.mxu0 0.0
    %992 = vmatpush1.msra.mxu0 0.0
    %993 = vmatprep.subr.mxu0 0.0
    %994 = vmatpush1.msra.mxu0 0.0
    %995 = vmatprep.subr.mxu0 0.0
    %996 = vmatpush1.msra.mxu0 0.0
    %997 = vmatprep.subr.mxu0 0.0
    %998 = vmatpush1.msra.mxu0 0.0
    %999 = vmatprep.subr.mxu0 0.0
    %1000 = vmatpush1.msra.mxu0 0.0
    %1001 = vmatprep.subr.mxu0 0.0
    %1002 = vmatpush1.msra.mxu0 0.0
    %1003 = vmatprep.subr.mxu0 0.0
    %1004 = vmatpush1.msra.mxu0 0.0
    %1005 = vmatprep.subr.mxu0 0.0
    %1006 = vmatpush1.msra.mxu0 0.0
    %1007 = vmatprep.subr.mxu0 0.0
    %1008 = vmatpush1.msra.mxu0 0.0
    %1009 = vmatprep.subr.mxu0 0.0
    %1010 = vmatpush1.msra.mxu0 0.0
    %1011 = vmatprep.subr.mxu0 0.0
    %1012 = vmatpush1.msra.mxu0 0.0
    %1013 = vmatprep.subr.mxu0 0.0
    %1014 = vmatpush1.msra.mxu0 0.0
    %1015 = vmatprep.subr.mxu0 0.0
    %1016 = vmatpush1.msra.mxu0 0.0
    %1017 = vmatprep.subr.mxu0 0.0
    %1018 = vmatpush1.msra.mxu0 0.0
    %1019 = vmatprep.subr.mxu0 0.0
    %1020 = vmatpush1.msra.mxu0 0.0
    %1021 = vmatprep.subr.mxu0 0.0
    %1022 = vmatpush1.msra.mxu0 0.0
    %1023 = vmatprep.subr.mxu0 0.0
    %1024 = vmatpush1.msra.mxu0 0.0
    %1025 = vmatprep.subr.mxu0 0.0
    %1026 = vmatpush1.msra.mxu0 0.0
    %1027 = vmatprep.subr.mxu0 0.0
    %1028 = vmatpush1.msra.mxu0 0.0
    %1029 = vmatprep.subr.mxu0 0.0
    %1030 = vmatpush1.msra.mxu0 0.0
    %1031 = vmatprep.mubr.f32.mxu0 0.0
    %v1032 = vand.u32 %v815, 4294901760
    %1033 = vmatmul.mubr.f32.gmra.mrb[0].mxu0 %v1032
    %v1034 = vpop.f32.mrb[0].mxu0
    %v1035 = vadd.f32 %v904, %v1034
    %v1036 = vpop.f32.mrb[0].mxu0
    %1037 = vmatprep.mubr.f32.mxu0 0.0
    %v1038 = vand.u32 %v818, 4294901760
    %1039 = vmatmul.mubr.f32.gmra.mrb[0].mxu0 %v1038
    %v1040 = vpop.f32.mrb[0].mxu0
    %v1041 = vadd.f32 %v914, %v1040
    %v1042 = vpop.f32.mrb[0].mxu0
    %1043 = vmatprep.mubr.f32.mxu0 0.0
    %v1044 = vand.u32 %v821, 4294901760
    %1045 = vmatmul.mubr.f32.gmra.mrb[0].mxu0 %v1044
    %v1046 = vpop.f32.mrb[0].mxu0
    %v1047 = vadd.f32 %v924, %v1046
    %v1048 = vpop.f32.mrb[0].mxu0
    %1049 = vmatprep.mubr.f32.mxu0 0.0
    %v1050 = vand.u32 %v824, 4294901760
    %1051 = vmatmul.mubr.f32.gmra.mrb[0].mxu0 %v1050
    %v1052 = vpop.f32.mrb[0].mxu0
    %v1053 = vadd.f32 %v934, %v1052
    %v1054 = vpop.f32.mrb[0].mxu0
    %1055 = vdwg.mxu0
    %1056 = vmatprep.subr.mxu0 0.0
    %v1057 = vand.u32 %v128, 4294901760
    %v1058 = vsub.f32 %v128, %v1057
    %1059 = vmatpush1.msra.mxu0 %v1058
    %1060 = vmatprep.subr.mxu0 0.0
    %v1061 = vand.u32 %v129, 4294901760
    %v1062 = vsub.f32 %v129, %v1061
    %1063 = vmatpush1.msra.mxu0 %v1062
    %1064 = vmatprep.subr.mxu0 0.0
    %v1065 = vand.u32 %v130, 4294901760
    %v1066 = vsub.f32 %v130, %v1065
    %1067 = vmatpush1.msra.mxu0 %v1066
    %1068 = vmatprep.subr.mxu0 0.0
    %v1069 = vand.u32 %v131, 4294901760
    %v1070 = vsub.f32 %v131, %v1069
    %1071 = vmatpush1.msra.mxu0 %v1070
    %1072 = vmatprep.subr.mxu0 0.0
    %v1073 = vand.u32 %v132, 4294901760
    %v1074 = vsub.f32 %v132, %v1073
    %1075 = vmatpush1.msra.mxu0 %v1074
    %1076 = vmatprep.subr.mxu0 0.0
    %v1077 = vand.u32 %v133, 4294901760
    %v1078 = vsub.f32 %v133, %v1077
    %1079 = vmatpush1.msra.mxu0 %v1078
    %1080 = vmatprep.subr.mxu0 0.0
    %1081 = vmatpush1.msra.mxu0 0.0
    %1082 = vmatprep.subr.mxu0 0.0
    %1083 = vmatpush1.msra.mxu0 0.0
    %1084 = vmatprep.subr.mxu0 0.0
    %1085 = vmatpush1.msra.mxu0 0.0
    %1086 = vmatprep.subr.mxu0 0.0
    %1087 = vmatpush1.msra.mxu0 0.0
    %1088 = vmatprep.subr.mxu0 0.0
    %1089 = vmatpush1.msra.mxu0 0.0
    %1090 = vmatprep.subr.mxu0 0.0
    %1091 = vmatpush1.msra.mxu0 0.0
    %1092 = vmatprep.subr.mxu0 0.0
    %1093 = vmatpush1.msra.mxu0 0.0
    %1094 = vmatprep.subr.mxu0 0.0
    %1095 = vmatpush1.msra.mxu0 0.0
    %1096 = vmatprep.subr.mxu0 0.0
    %1097 = vmatpush1.msra.mxu0 0.0
    %1098 = vmatprep.subr.mxu0 0.0
    %1099 = vmatpush1.msra.mxu0 0.0
    %1100 = vmatprep.subr.mxu0 0.0
    %1101 = vmatpush1.msra.mxu0 0.0
    %1102 = vmatprep.subr.mxu0 0.0
    %1103 = vmatpush1.msra.mxu0 0.0
    %1104 = vmatprep.subr.mxu0 0.0
    %1105 = vmatpush1.msra.mxu0 0.0
    %1106 = vmatprep.subr.mxu0 0.0
    %1107 = vmatpush1.msra.mxu0 0.0
    %1108 = vmatprep.subr.mxu0 0.0
    %1109 = vmatpush1.msra.mxu0 0.0
    %1110 = vmatprep.subr.mxu0 0.0
    %1111 = vmatpush1.msra.mxu0 0.0
    %1112 = vmatprep.subr.mxu0 0.0
    %1113 = vmatpush1.msra.mxu0 0.0
    %1114 = vmatprep.subr.mxu0 0.0
    %1115 = vmatpush1.msra.mxu0 0.0
    %1116 = vmatprep.subr.mxu0 0.0
    %1117 = vmatpush1.msra.mxu0 0.0
    %1118 = vmatprep.subr.mxu0 0.0
    %1119 = vmatpush1.msra.mxu0 0.0
    %1120 = vmatprep.subr.mxu0 0.0
    %1121 = vmatpush1.msra.mxu0 0.0
    %1122 = vmatprep.subr.mxu0 0.0
    %1123 = vmatpush1.msra.mxu0 0.0
    %1124 = vmatprep.subr.mxu0 0.0
    %1125 = vmatpush1.msra.mxu0 0.0
    %1126 = vmatprep.subr.mxu0 0.0
    %1127 = vmatpush1.msra.mxu0 0.0
    %1128 = vmatprep.subr.mxu0 0.0
    %1129 = vmatpush1.msra.mxu0 0.0
    %1130 = vmatprep.subr.mxu0 0.0
    %1131 = vmatpush1.msra.mxu0 0.0
    %1132 = vmatprep.mubr.f32.mxu0 0.0
    %v1133 = vand.u32 %v815, 4294901760
    %v1134 = vsub.f32 %v815, %v1133
    %1135 = vmatmul.mubr.f32.gmra.mrb[0].mxu0 %v1134
    %v1136 = vpop.f32.mrb[0].mxu0
    %v1137 = vadd.f32 %v1035, %v1136
    %v1138 = vpop.f32.mrb[0].mxu0
    %1139 = vmatprep.mubr.f32.mxu0 0.0
    %v1140 = vand.u32 %v818, 4294901760
    %v1141 = vsub.f32 %v818, %v1140
    %1142 = vmatmul.mubr.f32.gmra.mrb[0].mxu0 %v1141
    %v1143 = vpop.f32.mrb[0].mxu0
    %v1144 = vadd.f32 %v1041, %v1143
    %v1145 = vpop.f32.mrb[0].mxu0
    %1146 = vmatprep.mubr.f32.mxu0 0.0
    %v1147 = vand.u32 %v821, 4294901760
    %v1148 = vsub.f32 %v821, %v1147
    %1149 = vmatmul.mubr.f32.gmra.mrb[0].mxu0 %v1148
    %v1150 = vpop.f32.mrb[0].mxu0
    %v1151 = vadd.f32 %v1047, %v1150
    %v1152 = vpop.f32.mrb[0].mxu0
    %1153 = vmatprep.mubr.f32.mxu0 0.0
    %v1154 = vand.u32 %v824, 4294901760
    %v1155 = vsub.f32 %v824, %v1154
    %1156 = vmatmul.mubr.f32.gmra.mrb[0].mxu0 %v1155
    %v1157 = vpop.f32.mrb[0].mxu0
    %v1158 = vadd.f32 %v1053, %v1157
    %v1159 = vpop.f32.mrb[0].mxu0
    %1160 = vdwg.mxu0
    %1161 = vmatprep.subr.mxu0 0.0
    %v1162 = vand.u32 %v128, 4294901760
    %1163 = vmatpush1.msra.mxu0 %v1162
    %1164 = vmatprep.subr.mxu0 0.0
    %v1165 = vand.u32 %v129, 4294901760
    %1166 = vmatpush1.msra.mxu0 %v1165
    %1167 = vmatprep.subr.mxu0 0.0
    %v1168 = vand.u32 %v130, 4294901760
    %1169 = vmatpush1.msra.mxu0 %v1168
    %1170 = vmatprep.subr.mxu0 0.0
    %v1171 = vand.u32 %v131, 4294901760
    %1172 = vmatpush1.msra.mxu0 %v1171
    %1173 = vmatprep.subr.mxu0 0.0
    %v1174 = vand.u32 %v132, 4294901760
    %1175 = vmatpush1.msra.mxu0 %v1174
    %1176 = vmatprep.subr.mxu0 0.0
    %v1177 = vand.u32 %v133, 4294901760
    %1178 = vmatpush1.msra.mxu0 %v1177
    %1179 = vmatprep.subr.mxu0 0.0
    %1180 = vmatpush1.msra.mxu0 0.0
    %1181 = vmatprep.subr.mxu0 0.0
    %1182 = vmatpush1.msra.mxu0 0.0
    %1183 = vmatprep.subr.mxu0 0.0
    %1184 = vmatpush1.msra.mxu0 0.0
    %1185 = vmatprep.subr.mxu0 0.0
    %1186 = vmatpush1.msra.mxu0 0.0
    %1187 = vmatprep.subr.mxu0 0.0
    %1188 = vmatpush1.msra.mxu0 0.0
    %1189 = vmatprep.subr.mxu0 0.0
    %1190 = vmatpush1.msra.mxu0 0.0
    %1191 = vmatprep.subr.mxu0 0.0
    %1192 = vmatpush1.msra.mxu0 0.0
    %1193 = vmatprep.subr.mxu0 0.0
    %1194 = vmatpush1.msra.mxu0 0.0
    %1195 = vmatprep.subr.mxu0 0.0
    %1196 = vmatpush1.msra.mxu0 0.0
    %1197 = vmatprep.subr.mxu0 0.0
    %1198 = vmatpush1.msra.mxu0 0.0
    %1199 = vmatprep.subr.mxu0 0.0
    %1200 = vmatpush1.msra.mxu0 0.0
    %1201 = vmatprep.subr.mxu0 0.0
    %1202 = vmatpush1.msra.mxu0 0.0
    %1203 = vmatprep.subr.mxu0 0.0
    %1204 = vmatpush1.msra.mxu0 0.0
    %1205 = vmatprep.subr.mxu0 0.0
    %1206 = vmatpush1.msra.mxu0 0.0
    %1207 = vmatprep.subr.mxu0 0.0
    %1208 = vmatpush1.msra.mxu0 0.0
    %1209 = vmatprep.subr.mxu0 0.0
    %1210 = vmatpush1.msra.mxu0 0.0
    %1211 = vmatprep.subr.mxu0 0.0
    %1212 = vmatpush1.msra.mxu0 0.0
    %1213 = vmatprep.subr.mxu0 0.0
    %1214 = vmatpush1.msra.mxu0 0.0
    %1215 = vmatprep.subr.mxu0 0.0
    %1216 = vmatpush1.msra.mxu0 0.0
    %1217 = vmatprep.subr.mxu0 0.0
    %1218 = vmatpush1.msra.mxu0 0.0
    %1219 = vmatprep.subr.mxu0 0.0
    %1220 = vmatpush1.msra.mxu0 0.0
    %1221 = vmatprep.subr.mxu0 0.0
    %1222 = vmatpush1.msra.mxu0 0.0
    %1223 = vmatprep.subr.mxu0 0.0
    %1224 = vmatpush1.msra.mxu0 0.0
    %1225 = vmatprep.subr.mxu0 0.0
    %1226 = vmatpush1.msra.mxu0 0.0
    %1227 = vmatprep.subr.mxu0 0.0
    %1228 = vmatpush1.msra.mxu0 0.0
    %1229 = vmatprep.subr.mxu0 0.0
    %1230 = vmatpush1.msra.mxu0 0.0
    %1231 = vmatprep.mubr.f32.mxu0 0.0
    %v1232 = vand.u32 %v815, 4294901760
    %v1233 = vsub.f32 %v815, %v1232
    %v1234 = vand.u32 %v1233, 4294901760
    %1235 = vmatmul.mubr.f32.gmra.mrb[0].mxu0 %v1234
    %v1236 = vpop.f32.mrb[0].mxu0
    %v1237 = vadd.f32 %v1137, %v1236
    %v1238 = vpop.f32.mrb[0].mxu0
    %1239 = vmatprep.mubr.f32.mxu0 0.0
    %v1240 = vand.u32 %v818, 4294901760
    %v1241 = vsub.f32 %v818, %v1240
    %v1242 = vand.u32 %v1241, 4294901760
    %1243 = vmatmul.mubr.f32.gmra.mrb[0].mxu0 %v1242
    %v1244 = vpop.f32.mrb[0].mxu0
    %v1245 = vadd.f32 %v1144, %v1244
    %v1246 = vpop.f32.mrb[0].mxu0
    %1247 = vmatprep.mubr.f32.mxu0 0.0
    %v1248 = vand.u32 %v821, 4294901760
    %v1249 = vsub.f32 %v821, %v1248
    %v1250 = vand.u32 %v1249, 4294901760
    %1251 = vmatmul.mubr.f32.gmra.mrb[0].mxu0 %v1250
    %v1252 = vpop.f32.mrb[0].mxu0
    %v1253 = vadd.f32 %v1151, %v1252
    %v1254 = vpop.f32.mrb[0].mxu0
    %1255 = vmatprep.mubr.f32.mxu0 0.0
    %v1256 = vand.u32 %v824, 4294901760
    %v1257 = vsub.f32 %v824, %v1256
    %v1258 = vand.u32 %v1257, 4294901760
    %1259 = vmatmul.mubr.f32.gmra.mrb[0].mxu0 %v1258
    %v1260 = vpop.f32.mrb[0].mxu0
    %v1261 = vadd.f32 %v1158, %v1260
    %v1262 = vpop.f32.mrb[0].mxu0
    %1263 = vdwg.mxu0
    %1264 = vmatprep.subr.mxu0 0.0
    %v1265 = vand.u32 %v128, 4294901760
    %v1266 = vsub.f32 %v128, %v1265
    %v1267 = vand.u32 %v1266, 4294901760
    %1268 = vmatpush1.msra.mxu0 %v1267
    %1269 = vmatprep.subr.mxu0 0.0
    %v1270 = vand.u32 %v129, 4294901760
    %v1271 = vsub.f32 %v129, %v1270
    %v1272 = vand.u32 %v1271, 4294901760
    %1273 = vmatpush1.msra.mxu0 %v1272
    %1274 = vmatprep.subr.mxu0 0.0
    %v1275 = vand.u32 %v130, 4294901760
    %v1276 = vsub.f32 %v130, %v1275
    %v1277 = vand.u32 %v1276, 4294901760
    %1278 = vmatpush1.msra.mxu0 %v1277
    %1279 = vmatprep.subr.mxu0 0.0
    %v1280 = vand.u32 %v131, 4294901760
    %v1281 = vsub.f32 %v131, %v1280
    %v1282 = vand.u32 %v1281, 4294901760
    %1283 = vmatpush1.msra.mxu0 %v1282
    %1284 = vmatprep.subr.mxu0 0.0
    %v1285 = vand.u32 %v132, 4294901760
    %v1286 = vsub.f32 %v132, %v1285
    %v1287 = vand.u32 %v1286, 4294901760
    %1288 = vmatpush1.msra.mxu0 %v1287
    %1289 = vmatprep.subr.mxu0 0.0
    %v1290 = vand.u32 %v133, 4294901760
    %v1291 = vsub.f32 %v133, %v1290
    %v1292 = vand.u32 %v1291, 4294901760
    %1293 = vmatpush1.msra.mxu0 %v1292
    %1294 = vmatprep.subr.mxu0 0.0
    %1295 = vmatpush1.msra.mxu0 0.0
    %1296 = vmatprep.subr.mxu0 0.0
    %1297 = vmatpush1.msra.mxu0 0.0
    %1298 = vmatprep.subr.mxu0 0.0
    %1299 = vmatpush1.msra.mxu0 0.0
    %1300 = vmatprep.subr.mxu0 0.0
    %1301 = vmatpush1.msra.mxu0 0.0
    %1302 = vmatprep.subr.mxu0 0.0
    %1303 = vmatpush1.msra.mxu0 0.0
    %1304 = vmatprep.subr.mxu0 0.0
    %1305 = vmatpush1.msra.mxu0 0.0
    %1306 = vmatprep.subr.mxu0 0.0
    %1307 = vmatpush1.msra.mxu0 0.0
    %1308 = vmatprep.subr.mxu0 0.0
    %1309 = vmatpush1.msra.mxu0 0.0
    %1310 = vmatprep.subr.mxu0 0.0
    %1311 = vmatpush1.msra.mxu0 0.0
    %1312 = vmatprep.subr.mxu0 0.0
    %1313 = vmatpush1.msra.mxu0 0.0
    %1314 = vmatprep.subr.mxu0 0.0
    %1315 = vmatpush1.msra.mxu0 0.0
    %1316 = vmatprep.subr.mxu0 0.0
    %1317 = vmatpush1.msra.mxu0 0.0
    %1318 = vmatprep.subr.mxu0 0.0
    %1319 = vmatpush1.msra.mxu0 0.0
    %1320 = vmatprep.subr.mxu0 0.0
    %1321 = vmatpush1.msra.mxu0 0.0
    %1322 = vmatprep.subr.mxu0 0.0
    %1323 = vmatpush1.msra.mxu0 0.0
    %1324 = vmatprep.subr.mxu0 0.0
    %1325 = vmatpush1.msra.mxu0 0.0
    %1326 = vmatprep.subr.mxu0 0.0
    %1327 = vmatpush1.msra.mxu0 0.0
    %1328 = vmatprep.subr.mxu0 0.0
    %1329 = vmatpush1.msra.mxu0 0.0
    %1330 = vmatprep.subr.mxu0 0.0
    %1331 = vmatpush1.msra.mxu0 0.0
    %1332 = vmatprep.subr.mxu0 0.0
    %1333 = vmatpush1.msra.mxu0 0.0
    %1334 = vmatprep.subr.mxu0 0.0
    %1335 = vmatpush1.msra.mxu0 0.0
    %1336 = vmatprep.subr.mxu0 0.0
    %1337 = vmatpush1.msra.mxu0 0.0
    %1338 = vmatprep.subr.mxu0 0.0
    %1339 = vmatpush1.msra.mxu0 0.0
    %1340 = vmatprep.subr.mxu0 0.0
    %1341 = vmatpush1.msra.mxu0 0.0
    %1342 = vmatprep.subr.mxu0 0.0
    %1343 = vmatpush1.msra.mxu0 0.0
    %1344 = vmatprep.subr.mxu0 0.0
    %1345 = vmatpush1.msra.mxu0 0.0
    %1346 = vmatprep.mubr.f32.mxu0 0.0
    %v1347 = vand.u32 %v815, 4294901760
    %1348 = vmatmul.mubr.f32.gmra.mrb[0].mxu0 %v1347
    %v1349 = vpop.f32.mrb[0].mxu0
    %v1350 = vadd.f32 %v1237, %v1349
    %v1351 = vpop.f32.mrb[0].mxu0
    %1352 = vmatprep.mubr.f32.mxu0 0.0
    %v1353 = vand.u32 %v818, 4294901760
    %1354 = vmatmul.mubr.f32.gmra.mrb[0].mxu0 %v1353
    %v1355 = vpop.f32.mrb[0].mxu0
    %v1356 = vadd.f32 %v1245, %v1355
    %v1357 = vpop.f32.mrb[0].mxu0
    %1358 = vmatprep.mubr.f32.mxu0 0.0
    %v1359 = vand.u32 %v821, 4294901760
    %1360 = vmatmul.mubr.f32.gmra.mrb[0].mxu0 %v1359
    %v1361 = vpop.f32.mrb[0].mxu0
    %v1362 = vadd.f32 %v1253, %v1361
    %v1363 = vpop.f32.mrb[0].mxu0
    %1364 = vmatprep.mubr.f32.mxu0 0.0
    %v1365 = vand.u32 %v824, 4294901760
    %1366 = vmatmul.mubr.f32.gmra.mrb[0].mxu0 %v1365
    %v1367 = vpop.f32.mrb[0].mxu0
    %v1368 = vadd.f32 %v1261, %v1367
    %v1369 = vpop.f32.mrb[0].mxu0
    %1370 = vdwg.mxu0
    %1371 = vmatprep.subr.mxu0 0.0
    %v1372 = vand.u32 %v128, 4294901760
    %1373 = vmatpush1.msra.mxu0 %v1372
    %1374 = vmatprep.subr.mxu0 0.0
    %v1375 = vand.u32 %v129, 4294901760
    %1376 = vmatpush1.msra.mxu0 %v1375
    %1377 = vmatprep.subr.mxu0 0.0
    %v1378 = vand.u32 %v130, 4294901760
    %1379 = vmatpush1.msra.mxu0 %v1378
    %1380 = vmatprep.subr.mxu0 0.0
    %v1381 = vand.u32 %v131, 4294901760
    %1382 = vmatpush1.msra.mxu0 %v1381
    %1383 = vmatprep.subr.mxu0 0.0
    %v1384 = vand.u32 %v132, 4294901760
    %1385 = vmatpush1.msra.mxu0 %v1384
    %1386 = vmatprep.subr.mxu0 0.0
    %v1387 = vand.u32 %v133, 4294901760
    %1388 = vmatpush1.msra.mxu0 %v1387
    %1389 = vmatprep.subr.mxu0 0.0
    %1390 = vmatpush1.msra.mxu0 0.0
    %1391 = vmatprep.subr.mxu0 0.0
    %1392 = vmatpush1.msra.mxu0 0.0
    %1393 = vmatprep.subr.mxu0 0.0
    %1394 = vmatpush1.msra.mxu0 0.0
    %1395 = vmatprep.subr.mxu0 0.0
    %1396 = vmatpush1.msra.mxu0 0.0
    %1397 = vmatprep.subr.mxu0 0.0
    %1398 = vmatpush1.msra.mxu0 0.0
    %1399 = vmatprep.subr.mxu0 0.0
    %1400 = vmatpush1.msra.mxu0 0.0
    %1401 = vmatprep.subr.mxu0 0.0
    %1402 = vmatpush1.msra.mxu0 0.0
    %1403 = vmatprep.subr.mxu0 0.0
    %1404 = vmatpush1.msra.mxu0 0.0
    %1405 = vmatprep.subr.mxu0 0.0
    %1406 = vmatpush1.msra.mxu0 0.0
    %1407 = vmatprep.subr.mxu0 0.0
    %1408 = vmatpush1.msra.mxu0 0.0
    %1409 = vmatprep.subr.mxu0 0.0
    %1410 = vmatpush1.msra.mxu0 0.0
    %1411 = vmatprep.subr.mxu0 0.0
    %1412 = vmatpush1.msra.mxu0 0.0
    %1413 = vmatprep.subr.mxu0 0.0
    %1414 = vmatpush1.msra.mxu0 0.0
    %1415 = vmatprep.subr.mxu0 0.0
    %1416 = vmatpush1.msra.mxu0 0.0
    %1417 = vmatprep.subr.mxu0 0.0
    %1418 = vmatpush1.msra.mxu0 0.0
    %1419 = vmatprep.subr.mxu0 0.0
    %1420 = vmatpush1.msra.mxu0 0.0
    %1421 = vmatprep.subr.mxu0 0.0
    %1422 = vmatpush1.msra.mxu0 0.0
    %1423 = vmatprep.subr.mxu0 0.0
    %1424 = vmatpush1.msra.mxu0 0.0
    %1425 = vmatprep.subr.mxu0 0.0
    %1426 = vmatpush1.msra.mxu0 0.0
    %1427 = vmatprep.subr.mxu0 0.0
    %1428 = vmatpush1.msra.mxu0 0.0
    %1429 = vmatprep.subr.mxu0 0.0
    %1430 = vmatpush1.msra.mxu0 0.0
    %1431 = vmatprep.subr.mxu0 0.0
    %1432 = vmatpush1.msra.mxu0 0.0
    %1433 = vmatprep.subr.mxu0 0.0
    %1434 = vmatpush1.msra.mxu0 0.0
    %1435 = vmatprep.subr.mxu0 0.0
    %1436 = vmatpush1.msra.mxu0 0.0
    %1437 = vmatprep.subr.mxu0 0.0
    %1438 = vmatpush1.msra.mxu0 0.0
    %1439 = vmatprep.subr.mxu0 0.0
    %1440 = vmatpush1.msra.mxu0 0.0
    %1441 = vmatprep.mubr.f32.mxu0 0.0
    %v1442 = vand.u32 %v815, 4294901760
    %1443 = vmatmul.mubr.f32.gmra.mrb[0].mxu0 %v1442
    %v1444 = vpop.f32.mrb[0].mxu0
    %v1445 = vadd.f32 %v1350, %v1444
    %v1446 = vpop.f32.mrb[0].mxu0
    %1447 = vmatprep.mubr.f32.mxu0 0.0
    %v1448 = vand.u32 %v818, 4294901760
    %1449 = vmatmul.mubr.f32.gmra.mrb[0].mxu0 %v1448
    %v1450 = vpop.f32.mrb[0].mxu0
    %v1451 = vadd.f32 %v1356, %v1450
    %v1452 = vpop.f32.mrb[0].mxu0
    %1453 = vmatprep.mubr.f32.mxu0 0.0
    %v1454 = vand.u32 %v821, 4294901760
    %1455 = vmatmul.mubr.f32.gmra.mrb[0].mxu0 %v1454
    %v1456 = vpop.f32.mrb[0].mxu0
    %v1457 = vadd.f32 %v1362, %v1456
    %v1458 = vpop.f32.mrb[0].mxu0
    %1459 = vmatprep.mubr.f32.mxu0 0.0
    %v1460 = vand.u32 %v824, 4294901760
    %1461 = vmatmul.mubr.f32.gmra.mrb[0].mxu0 %v1460
    %v1462 = vpop.f32.mrb[0].mxu0
    %v1463 = vadd.f32 %v1368, %v1462
    %v1464 = vpop.f32.mrb[0].mxu0
    %1465 = vdwg.mxu0
    %v1466 = vmul.f32 %v792, %v1445
    %v1467 = vmul.f32 %v798, %v1451
    %v1468 = vmul.f32 %v804, %v1457
    %v1469 = vmul.f32 %v810, %v1463
    %v1470 = vadd.f32 %v1466, %v1467
    %v1471 = vadd.f32 %v1470, %v1468
    %v1472 = vadd.f32 %v1471, %v1469
    %v1473 = vrot.slane %v1472, 4
    %v1474 = vadd.f32 %v1472, %v1473
    %v1475 = vrot.slane %v1474, 2
    %v1476 = vadd.f32 %v1474, %v1475
    %v1477 = vrot.slane %v1476, 1
    %v1478 = vadd.f32 %v1476, %v1477
    %1479 = vst [vmem:[#allocation8] sm:$0x1] %v1478
    // Predicated region
    $region30: #{tpu_custom_call.1} parent=1 // pred_check
      _
    $region31: #{tpu_custom_call.1} parent=1 // pred_check_branch
      %1481 = sbr.rel (0) target = $region33
    $region32: #{tpu_custom_call.1} parent=1 // pred_region
      %s1483 = ssub.s32 16, 16
      %1484 = vsyncadd [#allocation4], %s1483
      %s1486 = sshll.u32 [#allocation8], 4
      %s1487 = int_to_ptr.vmem [resolvable:$true] %s1486
      %1489 = dma.vmem_to_hbm [thread:$0]  %s1487, 16, %s4, [#allocation4]
    $region33: #{tpu_custom_call.1} parent=1 // pred_fallthru
      _
    // Predicated region
    $region34: #{tpu_custom_call.1} parent=1 // pred_check
      _
    $region35: #{tpu_custom_call.1} parent=1 // pred_check_branch
      %1491 = sbr.rel (0) target = $region37
    $region36: #{tpu_custom_call.1} parent=1 // pred_region
      %1492 = dma.done [#allocation4], 16
    $region37: #{tpu_custom_call.1} parent=1 // pred_fallthru
      _
    %1493 = vsyncpa [#allocation3], 1
    %1494 = vsyncpa [#allocation6], 1
    %1495 = vsyncpa [#allocation4], 1

</llo_original>
